<compile_context>
chip_gen: v5e
topology: v5e:2x2
jax: 0.10.0
libtpu: 0.0.40
codegen_flags: <defaults>
</compile_context>

<pallas_src>
import functools

import jax
import jax.numpy as jnp
from jax.experimental import pallas as pl
from jax.experimental.pallas import tpu as pltpu


# ----------------------- fused conv(as one MXU matmul) + bias + ReLU kernel -----------------------
def _conv_relu_kernel(x_ref, h_ref, w_ref, b_ref, o_ref, *, nwin):
    # x_ref: (S*Cin, tL)          phase-split input tile (stride folded into channels)
    # h_ref: (S*Cin, Dp)          halo: first Dp columns of the NEXT tile
    # w_ref: (Cout, nwin*S*Cin)   folded conv weight
    # b_ref: (Cout, 1)            bias (f32)
    # o_ref: (Cout, tL)           output tile, lane-dense along L (NCL layout)
    tl = o_ref.shape[-1]
    if nwin == 1:
        taps = x_ref[...]                                            # (S*Cin, tL)
    else:
        xfull = jnp.concatenate([x_ref[...], h_ref[...]], axis=-1)   # (S*Cin, tL+Dp)
        # In-VMEM im2col: nwin shifted contiguous windows, stacked along the channel axis.
        taps = jnp.concatenate([xfull[:, d:d + tl] for d in range(nwin)], axis=0)
    y = jnp.dot(w_ref[...], taps, preferred_element_type=jnp.float32) + b_ref[...]
    o_ref[...] = jnp.maximum(y, 0.0).astype(o_ref.dtype)


def _pick_l_tile(l_out, sc, cout, nwin, itemsize):
    # Small outputs: one full-extent block (always legal wrt the (8,128) rule).
    if l_out < 256:
        return l_out
    # Otherwise split into >=2 lane-dense (multiple-of-128) tiles so the pipeline
    # double-buffers and multi-TC chips get >= 2*B programs, capped by a VMEM budget
    # (double-buffered x/out blocks + resident weight + in-kernel taps + f32 acc).
    kcef = nwin * sc
    budget = 16 * 1024 * 1024
    for tl in (512, 256, 128):
        if 2 * tl > l_out:
            continue
        est = (itemsize * (2 * sc * tl + 2 * cout * tl + 2 * cout * kcef + kcef * tl)
               + 4 * cout * tl)
        if est <= budget:
            return tl
    return 128


@functools.partial(jax.jit, static_argnames=("stride", "compute_dtype"))
def standard_conv1d_forward(x, weight, bias, stride, compute_dtype=None):
    """x: (B, Cin, L); weight: (Cout, Cin, K); bias: (Cout,).  Returns (B, Cout, L_out)."""
    B, Cin, L = x.shape
    Cout, _, K = weight.shape
    S = int(stride)
    P = S // 2                                   # PyTorch: padding = stride // 2
    l_out = (L + 2 * P - K) // S + 1
    nwin = (K - 1) // S + 1                      # stride-1 taps after folding stride into channels
    Dp = max(nwin - 1, 1)                        # halo columns materialized per tile (static)
    Sc = S * Cin

    in_dtype = x.dtype
    cdt = jnp.dtype(in_dtype if compute_dtype is None else compute_dtype)

    tL = _pick_l_tile(l_out, Sc, Cout, nwin, cdt.itemsize)
    nJ = -(-l_out // tL)
    Lq = nJ * tL + Dp                            # phase-split length incl. last tile's halo
    Lpf = Lq * S                                 # padded x length (elements the conv may read)

    # Single up-front pad of x to exactly Lpf (left conv padding + right zeros); trailing x
    # elements the strided conv never reads may be dropped (matches PyTorch).
    right = Lpf - P - L
    if right >= 0:
        xp = jnp.pad(x, ((0, 0), (0, 0), (P, right)))
    else:
        xp = jnp.pad(x[:, :, :Lpf - P], ((0, 0), (0, 0), (P, 0)))

    # Phase split: x_t[b, p*Cin + c, q] = xp[b, c, q*S + p].  One O(|x|) pass; afterwards the
    # stride-S conv is a stride-1 conv with nwin shifted windows over Sc channels.
    x_t = (xp.reshape(B, Cin, Lq, S).transpose(0, 3, 1, 2)
             .reshape(B, Sc, Lq).astype(cdt))
    x_main = x_t[:, :, :nJ * tL]                 # streamed tile-by-tile via BlockSpec (1x read)
    # Tiny halo input: first Dp columns of the NEXT tile, one (Sc, Dp) block per (b, j).
    cols = ((jnp.arange(nJ, dtype=jnp.int32)[:, None] + 1) * tL
            + jnp.arange(Dp, dtype=jnp.int32)[None, :]).reshape(-1)
    halo = (jnp.take(x_t, cols, axis=2)
              .reshape(B, Sc, nJ, Dp).transpose(0, 2, 1, 3))          # (B, nJ, Sc, Dp)

    # Fold the conv weight: Wbig[o, d*Sc + p*Cin + c] = W[o, c, d*S + p] (zero past K),
    # matching the in-kernel taps row order.
    Kp = nwin * S
    wp = jnp.pad(weight, ((0, 0), (0, 0), (0, Kp - K)))
    w2 = wp.transpose(0, 2, 1).reshape(Cout, nwin * Sc).astype(cdt)
    b2 = bias.astype(jnp.float32).reshape(Cout, 1)

    kcef = nwin * Sc
    cost = pl.CostEstimate(
        flops=2 * B * Cout * kcef * l_out,
        transcendentals=0,
        bytes_accessed=(x_main.size + halo.size + w2.size) * cdt.itemsize
        + (B * Cout * l_out + Cout) * jnp.dtype(in_dtype).itemsize)

    out = pl.pallas_call(
        functools.partial(_conv_relu_kernel, nwin=nwin),
        out_shape=jax.ShapeDtypeStruct((B, Cout, l_out), in_dtype),
        grid_spec=pltpu.PrefetchScalarGridSpec(
            num_scalar_prefetch=0,
            grid=(B, nJ),
            in_specs=[
                pl.BlockSpec((None, Sc, tL), lambda b, j: (b, 0, j)),            # x tile
                pl.BlockSpec((None, None, Sc, Dp), lambda b, j: (b, j, 0, 0)),   # halo
                pl.BlockSpec((Cout, kcef), lambda b, j: (0, 0)),                 # weight (resident)
                pl.BlockSpec((Cout, 1), lambda b, j: (0, 0)),                    # bias
            ],
            out_specs=pl.BlockSpec((None, Cout, tL), lambda b, j: (b, 0, j)),
        ),
        compiler_params=pltpu.CompilerParams(
            dimension_semantics=("parallel", "parallel"),
            vmem_limit_bytes=48 * 1024 * 1024),
        cost_estimate=cost,
    )(x_main, halo, w2, b2)
    return out


# ------------------------------------------------ test ------------------------------------------------
def _reference(x, weight, bias, stride):
    S = int(stride)
    P = S // 2
    y = jax.lax.conv_general_dilated(
        x, weight, window_strides=(S,), padding=[(P, P)],
        dimension_numbers=("NCH", "OIH", "NCH"),
        precision=jax.lax.Precision.HIGHEST)
    return jnp.maximum(y + bias[None, :, None], 0.0)


if __name__ == "__main__":
    key = jax.random.PRNGKey(0)

    # (B, Cin, L, Cout, K, S) -- integer-valued data keeps every precision path exact.
    cases = [
        (2, 4, 16, 8, 3, 2),      # small: single L tile, even stride (padding=1)
        (2, 4, 1026, 8, 5, 2),    # multi-tile along L, 3 taps per tile (K > stride)
        (2, 3, 64, 5, 3, 3),      # odd stride / non-8-aligned channel counts, no halo needed
    ]

    def make_inputs(idx, B, Cin, L, Cout, K):
        kx, kw, kb = jax.random.split(jax.random.fold_in(key, idx), 3)
        x = jax.random.randint(kx, (B, Cin, L), -3, 4).astype(jnp.float32)
        w = 0.5 * jax.random.randint(kw, (Cout, Cin, K), -3, 4).astype(jnp.float32)
        b = 0.25 * jax.random.randint(kb, (Cout,), -4, 5).astype(jnp.float32)
        return x, w, b

    for idx, (B, Cin, L, Cout, K, S) in enumerate(cases):
        x, w, b = make_inputs(idx, B, Cin, L, Cout, K)
        out = standard_conv1d_forward(x, w, b, S)
        jax.block_until_ready(out)
        ref = _reference(x, w, b, S)
        P = S // 2
        l_out = (L + 2 * P - K) // S + 1
        assert out.shape == (B, Cout, l_out), (out.shape, (B, Cout, l_out))
        err = float(jnp.max(jnp.abs(out - ref)))
        assert jnp.allclose(out, ref, rtol=0.0, atol=1e-5), (idx, err)

    # Optional bf16-operand / f32-accumulate fast path (perf review item).
    B, Cin, L, Cout, K, S = cases[0]
    x, w, b = make_inputs(0, B, Cin, L, Cout, K)
    out_bf16 = standard_conv1d_forward(x, w, b, S, compute_dtype=jnp.bfloat16)
    jax.block_until_ready(out_bf16)
    assert jnp.allclose(out_bf16, _reference(x, w, b, S), rtol=0.0, atol=1e-5)

    print("KERNEL_OK")
</pallas_src>

<mosaic_0001>
module attributes {stable_mosaic.version = 11 : i64} {
  func.func @_conv_relu_kernel(%arg0: i32, %arg1: i32, %arg2: memref<1x8x8xf32, #tpu.memory_space<vmem>>, %arg3: memref<1x1x8x1xf32, #tpu.memory_space<vmem>>, %arg4: memref<8x16xf32, #tpu.memory_space<vmem>>, %arg5: memref<8x1xf32, #tpu.memory_space<vmem>>, %arg6: memref<1x8x8xf32, #tpu.memory_space<vmem>>) attributes {dimension_semantics = [#tpu.dimension_semantics<parallel>, #tpu.dimension_semantics<parallel>], iteration_bounds = array<i64: 2, 1>, scalar_prefetch = 0 : i64, scratch_operands = 0 : i64, tpu.core_type = #tpu.core_type<tc>, window_params = [{transform_indices = @transform_0, window_bounds = array<i64: 1, 8, 8>}, {transform_indices = @transform_1, window_bounds = array<i64: 1, 1, 8, 1>}, {pipeline_mode = #tpu.pipeline_mode<synchronous>, transform_indices = @transform_2, window_bounds = array<i64: 8, 16>}, {pipeline_mode = #tpu.pipeline_mode<synchronous>, transform_indices = @transform_3, window_bounds = array<i64: 8, 1>}, {transform_indices = @transform_4, window_bounds = array<i64: 1, 8, 8>}]} {
    %c0 = arith.constant 0 : index
    %c0_0 = arith.constant 0 : index
    %c0_1 = arith.constant 0 : index
    %0 = vector.load %arg2[%c0, %c0_0, %c0_1] : memref<1x8x8xf32, #tpu.memory_space<vmem>>, vector<1x8x8xf32>
    %1 = vector.shape_cast %0 : vector<1x8x8xf32> to vector<8x8xf32>
    %c0_2 = arith.constant 0 : index
    %c0_3 = arith.constant 0 : index
    %c0_4 = arith.constant 0 : index
    %c0_5 = arith.constant 0 : index
    %2 = vector.load %arg3[%c0_2, %c0_3, %c0_4, %c0_5] : memref<1x1x8x1xf32, #tpu.memory_space<vmem>>, vector<1x1x8x1xf32>
    %3 = vector.shape_cast %2 : vector<1x1x8x1xf32> to vector<8x1xf32>
    %4 = tpu.concatenate %1, %3 in 1 : vector<8x8xf32>, vector<8x1xf32> -> vector<8x9xf32>
    %5 = vector.extract_strided_slice %4 {offsets = [0, 0], sizes = [8, 8], strides = [1, 1]} : vector<8x9xf32> to vector<8x8xf32>
    %6 = vector.extract_strided_slice %4 {offsets = [0, 1], sizes = [8, 8], strides = [1, 1]} : vector<8x9xf32> to vector<8x8xf32>
    %7 = tpu.concatenate %5, %6 in 0 : vector<8x8xf32>, vector<8x8xf32> -> vector<16x8xf32>
    %c0_6 = arith.constant 0 : index
    %c0_7 = arith.constant 0 : index
    %8 = vector.load %arg4[%c0_6, %c0_7] : memref<8x16xf32, #tpu.memory_space<vmem>>, vector<8x16xf32>
    %cst = arith.constant dense<0.000000e+00> : vector<8x8xf32>
    %9 = tpu.matmul %8, %7, %cst {dimension_numbers = #tpu.dot_dimension_numbers<[1], [0], [0], [1], [0, 0, 1, 1], [], []>} : vector<8x16xf32>, vector<16x8xf32>, vector<8x8xf32> -> vector<8x8xf32>
    %c0_8 = arith.constant 0 : index
    %c0_9 = arith.constant 0 : index
    %10 = vector.load %arg5[%c0_8, %c0_9] : memref<8x1xf32, #tpu.memory_space<vmem>>, vector<8x1xf32>
    %11 = vector.broadcast %10 : vector<8x1xf32> to vector<8x8xf32>
    %12 = arith.addf %9, %11 : vector<8x8xf32>
    %cst_10 = arith.constant 0.000000e+00 : f32
    %13 = vector.broadcast %cst_10 : f32 to vector<8x8xf32>
    %14 = arith.maximumf %12, %13 : vector<8x8xf32>
    %c0_11 = arith.constant 0 : index
    %c0_12 = arith.constant 0 : index
    %c0_13 = arith.constant 0 : index
    %15 = vector.load %arg6[%c0_11, %c0_12, %c0_13] : memref<1x8x8xf32, #tpu.memory_space<vmem>>, vector<1x8x8xf32>
    %16 = vector.shape_cast %15 : vector<1x8x8xf32> to vector<8x8xf32>
    %17 = vector.shape_cast %14 : vector<8x8xf32> to vector<1x8x8xf32>
    tpu.vector_store %arg6[%c0_11, %c0_12, %c0_13], %17 {strides = array<i32>} : memref<1x8x8xf32, #tpu.memory_space<vmem>>, vector<1x8x8xf32>,
    return
  }
  func.func @transform_0(%arg0: i32, %arg1: i32) -> (i32, i32, i32) {
    %c0_i32 = arith.constant 0 : i32
    %c0_i32_0 = arith.constant 0 : i32
    return %arg0, %c0_i32, %arg1 : i32, i32, i32
  }
  func.func @transform_1(%arg0: i32, %arg1: i32) -> (i32, i32, i32, i32) {
    %c0_i32 = arith.constant 0 : i32
    %c0_i32_0 = arith.constant 0 : i32
    %c0_i32_1 = arith.constant 0 : i32
    return %arg0, %arg1, %c0_i32, %c0_i32_0 : i32, i32, i32, i32
  }
  func.func @transform_2(%arg0: i32, %arg1: i32) -> (i32, i32) {
    %c0_i32 = arith.constant 0 : i32
    %c0_i32_0 = arith.constant 0 : i32
    %c0_i32_1 = arith.constant 0 : i32
    return %c0_i32, %c0_i32_0 : i32, i32
  }
  func.func @transform_3(%arg0: i32, %arg1: i32) -> (i32, i32) {
    %c0_i32 = arith.constant 0 : i32
    %c0_i32_0 = arith.constant 0 : i32
    %c0_i32_1 = arith.constant 0 : i32
    return %c0_i32, %c0_i32_0 : i32, i32
  }
  func.func @transform_4(%arg0: i32, %arg1: i32) -> (i32, i32, i32) {
    %c0_i32 = arith.constant 0 : i32
    %c0_i32_0 = arith.constant 0 : i32
    return %arg0, %c0_i32, %arg1 : i32, i32, i32
  }
}

</mosaic_0001>

<llo_original>
// kernel: standard_conv1d_forward.1
$region0: #{standard_conv1d_forward.1}
  #allocation0 [shape = 'u32[]', space=smem, size = 0x4, offset = 0x4, fixed_abs, tag = 'smem constant byte address 0x4 - core index']
  #allocation1 [shape = 'u32[72,128]{1,0:T(1,128)}', space=vmem, size = 0x9000, scoped, tag = 'internal scratch']
  %s0 = inlined_call_operand.vmem [shape: f32[2,8,8], index: 0, kind: input, shape index: {}]
  %s1 = inlined_call_operand.vmem [shape: f32[2,1,8,1], index: 1, kind: input, shape index: {}]
  %s2 = inlined_call_operand.vmem [shape: f32[8,16], index: 2, kind: input, shape index: {}]
  %s3 = inlined_call_operand.vmem [shape: f32[8,1], index: 3, kind: input, shape index: {}]
  %s4 = inlined_call_operand.hbm [shape: f32[2,8,8], index: 4, kind: output, shape index: {}]
  %s5 = sld [smem:[#allocation0]]
  $region49: #{standard_conv1d_forward.1} parent=0
    _
  %s7 = ssub.s32 1, %s5
  %s8 = scalar_select 0, %s7, %s5
  $region1: #{standard_conv1d_forward.1} parent=0
    #allocation2 [shape = 'u8[8192]{0}', space=vmem, size = 0x2000, scoped, tag = 'output window, operand 0']
    #allocation3 [shape = 's32[2]{0}', space=sflag, size = 0x8, scoped, tag = 'scoped memory for standard_conv1d_forward.1']
    %9 = vsyncpa [#allocation3], 0
    %s10 = scalar_lea.sflag [#allocation3], 1
    %11 = vsyncpa %s10, 0
    loop: start=0, step=1, limit=4
    $region2: #{standard_conv1d_forward.1} parent=1 // loop_pre_header
      _
    $region3: #{standard_conv1d_forward.1} parent=1 // loop_header
      %s13 = sphi 0, %s17
      %p14 = scmp.ge.s32.totalorder %s13, 4
      %s20 = sphi 0, %s32
      %s21 = sphi 0, %s28
      %s22 = sphi 0, %s20
      %s23 = sphi 0, %s21
      %s24 = sphi 0, %s22
      %s25 = sphi 0, %s23
      %s37 = sphi 0, %s39
      %s40 = sphi 0, %s37
      %s41 = sphi 0, %s40
      %s57 = sphi 0, %s41
      %s65 = sphi 0, %s67
      %s68 = sphi 0, %s65
      %s69 = sphi 0, %s68
      %s85 = sphi 0, %s69
      %s89 = sphi 0, %s89
      %s91 = sphi 0, %s89
      %s92 = sphi 0, %s91
      %s106 = sphi 0, %s92
      %s110 = sphi 0, %s110
      %s112 = sphi 0, %s110
      %s113 = sphi 0, %s112
      %s127 = sphi 0, %s113
      %s135 = sphi 0, %s137
      %s138 = sphi 0, %s135
      %s139 = sphi 0, %s138
      %s155 = sphi 0, %s139
    $region4: #{standard_conv1d_forward.1} parent=1 // loop_header_branch
      %16 = sbr.rel (%p14) target = $region8
    $region5: #{standard_conv1d_forward.1} parent=1 // loop_body
      %s18 = ssub.s32 %s13, 1
      %s19 = ssub.s32 %s13, 2
      %s26 = sadd.s32 1, %s21
      %p27 = scmp.ge.s32.totalorder %s26, 1
      %s28 = scalar_select %p27, 0, %s26
      %s29 = sadd.s32 1, %s20
      %s30 = scalar_select %p27, %s29, %s20
      %p31 = scmp.ge.s32.totalorder %s30, 2
      %s32 = scalar_select %p31, 0, %s30
      %s33 = ssub.s32 %s20, %s32
      %s34 = ssub.s32 %s21, %s28
      %s35 = sor.u32 %s33, %s34
      %p36 = scmp.eq.s32.totalorder %s35, 0
      %s38 = sadd.s32 %s37, 1
      %s39 = scalar_select %p36, %s37, %s38
      %p42 = pneg %p36
      %p43 = scmp.eq.s32.totalorder %s13, 1
      %p44 = por %p42, %p43
      %p45 = scmp.ne.s32.totalorder %s37, %s40
      %p46 = scmp.eq.s32.totalorder %s13, 0
      %p47 = por %p45, %p46
      %p48 = scmp.ne.s32.totalorder %s37, %s40
      %p49 = scmp.eq.s32.totalorder %s18, 1
      %p50 = por %p48, %p49
      %p51 = scmp.ne.s32.totalorder %s40, %s41
      %p52 = scmp.eq.s32.totalorder %s18, 0
      %p53 = por %p51, %p52
      %p54 = scmp.ne.s32.totalorder %s40, %s41
      %p55 = scmp.eq.s32.totalorder %s19, 1
      %p56 = por %p54, %p55
      %p58 = scmp.ne.s32.totalorder %s41, %s57
      %p59 = scmp.eq.s32.totalorder %s19, 0
      %p60 = por %p58, %p59
      %s61 = ssub.s32 %s20, %s32
      %s62 = ssub.s32 %s21, %s28
      %s63 = sor.u32 %s61, %s62
      %p64 = scmp.eq.s32.totalorder %s63, 0
      %s66 = sadd.s32 %s65, 1
      %s67 = scalar_select %p64, %s65, %s66
      %p70 = pneg %p64
      %p71 = scmp.eq.s32.totalorder %s13, 1
      %p72 = por %p70, %p71
      %p73 = scmp.ne.s32.totalorder %s65, %s68
      %p74 = scmp.eq.s32.totalorder %s13, 0
      %p75 = por %p73, %p74
      %p76 = scmp.ne.s32.totalorder %s65, %s68
      %p77 = scmp.eq.s32.totalorder %s18, 1
      %p78 = por %p76, %p77
      %p79 = scmp.ne.s32.totalorder %s68, %s69
      %p80 = scmp.eq.s32.totalorder %s18, 0
      %p81 = por %p79, %p80
      %p82 = scmp.ne.s32.totalorder %s68, %s69
      %p83 = scmp.eq.s32.totalorder %s19, 1
      %p84 = por %p82, %p83
      %p86 = scmp.ne.s32.totalorder %s69, %s85
      %p87 = scmp.eq.s32.totalorder %s19, 0
      %p88 = por %p86, %p87
      %s90 = sadd.s32 %s89, 1
      %p93 = scmp.eq.s32.totalorder %s13, 1
      %p94 = scmp.ne.s32.totalorder %s89, %s91
      %p95 = scmp.eq.s32.totalorder %s13, 0
      %p96 = por %p94, %p95
      %p97 = scmp.ne.s32.totalorder %s89, %s91
      %p98 = scmp.eq.s32.totalorder %s18, 1
      %p99 = por %p97, %p98
      %p100 = scmp.ne.s32.totalorder %s91, %s92
      %p101 = scmp.eq.s32.totalorder %s18, 0
      %p102 = por %p100, %p101
      %p103 = scmp.ne.s32.totalorder %s91, %s92
      %p104 = scmp.eq.s32.totalorder %s19, 1
      %p105 = por %p103, %p104
      %p107 = scmp.ne.s32.totalorder %s92, %s106
      %p108 = scmp.eq.s32.totalorder %s19, 0
      %p109 = por %p107, %p108
      %s111 = sadd.s32 %s110, 1
      %p114 = scmp.eq.s32.totalorder %s13, 1
      %p115 = scmp.ne.s32.totalorder %s110, %s112
      %p116 = scmp.eq.s32.totalorder %s13, 0
      %p117 = por %p115, %p116
      %p118 = scmp.ne.s32.totalorder %s110, %s112
      %p119 = scmp.eq.s32.totalorder %s18, 1
      %p120 = por %p118, %p119
      %p121 = scmp.ne.s32.totalorder %s112, %s113
      %p122 = scmp.eq.s32.totalorder %s18, 0
      %p123 = por %p121, %p122
      %p124 = scmp.ne.s32.totalorder %s112, %s113
      %p125 = scmp.eq.s32.totalorder %s19, 1
      %p126 = por %p124, %p125
      %p128 = scmp.ne.s32.totalorder %s113, %s127
      %p129 = scmp.eq.s32.totalorder %s19, 0
      %p130 = por %p128, %p129
      %s131 = ssub.s32 %s20, %s32
      %s132 = ssub.s32 %s21, %s28
      %s133 = sor.u32 %s131, %s132
      %p134 = scmp.eq.s32.totalorder %s133, 0
      %s136 = sadd.s32 %s135, 1
      %s137 = scalar_select %p134, %s135, %s136
      %p140 = pneg %p134
      %p141 = scmp.eq.s32.totalorder %s13, 1
      %p142 = por %p140, %p141
      %p143 = scmp.ne.s32.totalorder %s135, %s138
      %p144 = scmp.eq.s32.totalorder %s13, 0
      %p145 = por %p143, %p144
      %p146 = scmp.ne.s32.totalorder %s135, %s138
      %p147 = scmp.eq.s32.totalorder %s18, 1
      %p148 = por %p146, %p147
      %p149 = scmp.ne.s32.totalorder %s138, %s139
      %p150 = scmp.eq.s32.totalorder %s18, 0
      %p151 = por %p149, %p150
      %p152 = scmp.ne.s32.totalorder %s138, %s139
      %p153 = scmp.eq.s32.totalorder %s19, 1
      %p154 = por %p152, %p153
      %p156 = scmp.ne.s32.totalorder %s139, %s155
      %p157 = scmp.eq.s32.totalorder %s19, 0
      %p158 = por %p156, %p157
      %p159 = scmp.le.s32.totalorder 1, %s13
      %p160 = scmp.lt.s32.totalorder %s13, 3
      %p161 = pnand %p159, %p160
      %p162 = pneg %p161
      // Predicated region
      $region9: #{standard_conv1d_forward.1} parent=5 // pred_check
        _
      $region10: #{standard_conv1d_forward.1} parent=5 // pred_check_branch
        %164 = sbr.rel (%p161) target = $region12
      $region11: #{standard_conv1d_forward.1} parent=5 // pred_region
        %s165 = ssub.s32 %s13, 1
        // Predicated region
        $region13: #{standard_conv1d_forward.1} parent=11 // pred_check
          %p166 = pneg %p102
        $region14: #{standard_conv1d_forward.1} parent=11 // pred_check_branch
          %168 = sbr.rel (%p166) target = $region16
        $region15: #{standard_conv1d_forward.1} parent=11 // pred_region
          _
        $region16: #{standard_conv1d_forward.1} parent=11 // pred_fallthru
          _
        // Predicated region
        $region17: #{standard_conv1d_forward.1} parent=11 // pred_check
          %p169 = pneg %p123
        $region18: #{standard_conv1d_forward.1} parent=11 // pred_check_branch
          %171 = sbr.rel (%p169) target = $region20
        $region19: #{standard_conv1d_forward.1} parent=11 // pred_region
          _
        $region20: #{standard_conv1d_forward.1} parent=11 // pred_fallthru
          _
      $region12: #{standard_conv1d_forward.1} parent=5 // pred_fallthru
        _
      %p172 = scmp.lt.s32.totalorder %s13, 2
      // Predicated region
      $region21: #{standard_conv1d_forward.1} parent=5 // pred_check
        %p173 = pneg %p172
      $region22: #{standard_conv1d_forward.1} parent=5 // pred_check_branch
        %175 = sbr.rel (%p173) target = $region24
      $region23: #{standard_conv1d_forward.1} parent=5 // pred_region
        // Predicated region
        $region25: #{standard_conv1d_forward.1} parent=23 // pred_check
          %p176 = pneg %p47
        $region26: #{standard_conv1d_forward.1} parent=23 // pred_check_branch
          %178 = sbr.rel (%p176) target = $region28
        $region27: #{standard_conv1d_forward.1} parent=23 // pred_region
          %p179 = scmp.lt.s32.totalorder %s20, 1
          %s180 = scalar_select %p179, %s20, 1
          %p181 = scmp.lt.s32.totalorder %s21, 0
          %s182 = scalar_select %p181, %s21, 0
          %s183 = sadd.s32 %s182, %s180
          %s184 = smul.addr %s183, 8
          %s185 = scalar_lea.vmem %s0, %s184
        $region28: #{standard_conv1d_forward.1} parent=23 // pred_fallthru
          _
        // Predicated region
        $region29: #{standard_conv1d_forward.1} parent=23 // pred_check
          %p186 = pneg %p75
        $region30: #{standard_conv1d_forward.1} parent=23 // pred_check_branch
          %188 = sbr.rel (%p186) target = $region32
        $region31: #{standard_conv1d_forward.1} parent=23 // pred_region
          %p189 = scmp.lt.s32.totalorder %s20, 1
          %s190 = scalar_select %p189, %s20, 1
          %p191 = scmp.lt.s32.totalorder %s21, 0
          %s192 = scalar_select %p191, %s21, 0
          %s193 = sadd.s32 %s192, %s190
          %s194 = smul.addr %s193, 8
          %s195 = scalar_lea.vmem %s1, %s194
        $region32: #{standard_conv1d_forward.1} parent=23 // pred_fallthru
          _
      $region24: #{standard_conv1d_forward.1} parent=5 // pred_fallthru
        _
      %p196 = scmp.le.s32.totalorder 1, %s13
      %p197 = scmp.lt.s32.totalorder %s13, 3
      %p198 = pnand %p196, %p197
      %p199 = pneg %p198
      // Predicated region
      $region33: #{standard_conv1d_forward.1} parent=5 // pred_check
        _
      $region34: #{standard_conv1d_forward.1} parent=5 // pred_check_branch
        %201 = sbr.rel (%p198) target = $region36
      $region35: #{standard_conv1d_forward.1} parent=5 // pred_region
        %s202 = ssub.s32 %s13, 1
        %p203 = scmp.lt.s32.totalorder %s22, 1
        %s204 = scalar_select %p203, %s22, 1
        %p205 = scmp.lt.s32.totalorder %s23, 0
        %s206 = scalar_select %p205, %s23, 0
        %s207 = sadd.s32 %s206, %s204
        %s208 = smul.addr %s207, 8
        %s209 = scalar_lea.vmem %s0, %s208
        %p210 = pneg %p53
        %p211 = pneg %p50
        %p212 = scmp.lt.s32.totalorder %s22, 1
        %s213 = scalar_select %p212, %s22, 1
        %p214 = scmp.lt.s32.totalorder %s23, 0
        %s215 = scalar_select %p214, %s23, 0
        %s216 = sadd.s32 %s215, %s213
        %s217 = smul.addr %s216, 8
        %s218 = scalar_lea.vmem %s1, %s217
        %p219 = pneg %p81
        %p220 = pneg %p78
        %p221 = pneg %p102
        %p222 = pneg %p99
        %p223 = pneg %p123
        %p224 = pneg %p120
        %p225 = pneg %p151
        %p226 = pneg %p148
        %s227 = sand.u32 %s138, 1
        %s228 = scalar_lea.sflag [#allocation3], %s227
        %s229 = sand.u32 %s138, 1
        %s230 = smul.addr %s229, 8
        %s231 = scalar_lea.vmem [#allocation2], %s230
        %p232 = scmp.lt.s32.totalorder %s22, 1
        %s233 = scalar_select %p232, %s22, 1
        %p234 = scmp.lt.s32.totalorder %s23, 0
        %s235 = scalar_select %p234, %s23, 0
        %s236 = sadd.s32 %s235, %s233
        %s237 = smul.addr %s236, 8
        %s238 = scalar_lea.vmem %s0, %s237
        %p239 = scmp.lt.s32.totalorder %s22, 1
        %s240 = scalar_select %p239, %s22, 1
        %p241 = scmp.lt.s32.totalorder %s23, 0
        %s242 = scalar_select %p241, %s23, 0
        %s243 = sadd.s32 %s242, %s240
        %s244 = smul.addr %s243, 8
        %s245 = scalar_lea.vmem %s1, %s244
        %v246 = vld [vmem:[%s238] sm:$0xff]
        %v247 = vld [vmem:[%s245] sm:$0xff]
        %249 = vrot.lane.b32.xlu0 %v247, 8
        %v250 = vpop.permute.xlu0 %249
        %vm252 = vcmask 64512
        %v253 = vsel %vm252, %v246, %v250
        %255 = vrot.lane.b32.xlu0 %v253, 127
        %v256 = vpop.permute.xlu0 %255
        %v258 = vld [vmem:[%s2] sm:$0xff]
        %v259 = vld [vmem:[%s3] sm:$0xff]
        %261 = vset.pattern.permute.xlu0 0
        %262 = vperm.xlu0 %261, %v259
        %v263 = vpop.permute.xlu0 %262
        %vm265 = vcmask 130048
        %v267 = vsel %vm265, %v258, 0
        %269 = vmatpush.msra.mxu0 0.0
        %270 = vmatpush.msra.mxu0 0.0
        %271 = vmatpush.msra.mxu0 0.0
        %272 = vmatpush.msra.mxu0 0.0
        %273 = vmatpush.msra.mxu0 0.0
        %274 = vmatpush.msra.mxu0 0.0
        %275 = vmatpush.msra.mxu0 0.0
        %276 = vmatpush.msra.mxu0 0.0
        %277 = vmatpush.msra.mxu0 0.0
        %278 = vmatpush.msra.mxu0 0.0
        %279 = vmatpush.msra.mxu0 0.0
        %280 = vmatpush.msra.mxu0 0.0
        %281 = vmatpush.msra.mxu0 0.0
        %282 = vmatpush.msra.mxu0 0.0
        %283 = vmatpush.msra.mxu0 %v256
        %284 = vmatpush.msra.mxu0 %v253
        %285 = vmatmul.f32.gmra.mxu0 %v267
        %v286 = vpop.f32.mrf.mxu0
        %v287 = vadd.f32 %v263, %v286
        %288 = vdwg.mxu0
        %v289 = vmax.f32 %v287, 0.0
        %290 = vst.msk [vmem:[%s231] sm:$0xff] %vm252, %v289
        %s291 = sand.u32 %s138, 1
        %s292 = scalar_lea.sflag [#allocation3], %s291
        %s293 = sand.u32 %s138, 1
        %s294 = smul.addr %s293, 8
        %s295 = scalar_lea.vmem [#allocation2], %s294
        // Predicated region
        $region37: #{standard_conv1d_forward.1} parent=35 // pred_check
          %p296 = pneg %p148
        $region38: #{standard_conv1d_forward.1} parent=35 // pred_check_branch
          %298 = sbr.rel (%p296) target = $region40
        $region39: #{standard_conv1d_forward.1} parent=35 // pred_region
          %300 = vsyncadd %s292, 0
          %s301 = sadd.s32 %s23, %s22
          %s302 = smul.addr %s301, 8
          %s303 = scalar_lea.hbm %s4, %s302
          %s305 = sshll.u32 %s295, 4
          %s306 = int_to_ptr.vmem [resolvable:$true] %s305
          %s307 = sshll.u32 %s303, 4
          %s308 = int_to_ptr.hbm [resolvable:$true] %s307
          %310 = dma.vmem_to_hbm [thread:$0]  %s306, 128, %s308, %s292
        $region40: #{standard_conv1d_forward.1} parent=35 // pred_fallthru
          _
      $region36: #{standard_conv1d_forward.1} parent=5 // pred_fallthru
        _
      %p311 = scmp.le.s32.totalorder 2, %s13
      // Predicated region
      $region41: #{standard_conv1d_forward.1} parent=5 // pred_check
        %p312 = pneg %p311
      $region42: #{standard_conv1d_forward.1} parent=5 // pred_check_branch
        %314 = sbr.rel (%p312) target = $region44
      $region43: #{standard_conv1d_forward.1} parent=5 // pred_region
        %s315 = ssub.s32 %s13, 2
        // Predicated region
        $region45: #{standard_conv1d_forward.1} parent=43 // pred_check
          %p316 = pneg %p154
        $region46: #{standard_conv1d_forward.1} parent=43 // pred_check_branch
          %318 = sbr.rel (%p316) target = $region48
        $region47: #{standard_conv1d_forward.1} parent=43 // pred_region
          %s319 = sand.u32 %s139, 1
          %s320 = scalar_lea.sflag [#allocation3], %s319
          %s321 = sand.u32 %s139, 1
          %s322 = smul.addr %s321, 8
          %s323 = scalar_lea.vmem [#allocation2], %s322
          %325 = dma.done %s320, 128
        $region48: #{standard_conv1d_forward.1} parent=43 // pred_fallthru
          _
      $region44: #{standard_conv1d_forward.1} parent=5 // pred_fallthru
        _
    $region6: #{standard_conv1d_forward.1} parent=1 // loop_footer
      %s17 = sadd.s32 1, %s13
    $region7: #{standard_conv1d_forward.1} parent=1 // loop_footer_branch
      %12 = sbr.rel target = $region3
    $region8: #{standard_conv1d_forward.1} parent=1 // loop_exit
      _
    %326 = vsyncpa [#allocation3], 1
    %s327 = scalar_lea.sflag [#allocation3], 1
    %328 = vsyncpa %s327, 1

</llo_original>
